<compile_context>
chip_gen: v6e
topology: v6e:2x2x1
jax: 0.10.0
libtpu: 0.0.40
codegen_flags: <defaults>
</compile_context>

<pallas_src>
from functools import partial

import jax
import jax.numpy as jnp
from jax.experimental import pallas as pl
from jax.experimental.pallas import tpu as pltpu

_SUBLANE = 8


def _round_up(v, m):
    return ((v + m - 1) // m) * m


def _embed_kernel(x_ref, w_ref, pos_ref, out_ref):
    # x_ref  : (tm, K)   row tile of the patch matrix (bf16 or f32)
    # w_ref  : (K, C)    flattened, pre-transposed conv weight (grid-invariant)
    # pos_ref: (tm, C)   per-row (position embedding + conv bias), f32
    # out_ref: (tm, C)   output tile
    y = jnp.dot(x_ref[...], w_ref[...], preferred_element_type=jnp.float32)
    out_ref[...] = (y + pos_ref[...].astype(jnp.float32)).astype(out_ref.dtype)


def _choose_row_tiling(M, K, C, x_itemsize, pos_itemsize, out_itemsize):
    """Pick (tm, n_tiles, M_pad): tm % 8 == 0, VMEM-budgeted, >=2 tiles if possible."""
    # Double-buffered x / pos / out tiles + f32 dot temp, per row of the tile.
    row_bytes = 2 * K * x_itemsize + 2 * C * pos_itemsize + 2 * C * out_itemsize + 4 * C
    w_bytes = K * C * x_itemsize
    budget = 20 * 1024 * 1024            # keep well under the 32 MiB scoped limit
    tm_cap = max(_SUBLANE, ((max(budget - w_bytes, row_bytes)) // row_bytes)
                 // _SUBLANE * _SUBLANE)
    tm_max = min(2048, tm_cap)           # ~1024-2048 rows/tile is the sweet spot

    min_tiles = 2 if M >= 2 * _SUBLANE else 1   # >=2 tiles -> v7x 2-TC sharding
    n_tiles = max(min_tiles, pl.cdiv(M, tm_max))
    tm = min(_round_up(pl.cdiv(M, n_tiles), _SUBLANE), tm_max)
    n_tiles = pl.cdiv(M, tm)
    M_pad = tm * n_tiles
    return tm, n_tiles, M_pad


@partial(jax.jit, static_argnames=("patch_size", "matmul_dtype"))
def channel_embeddings(x_nchw, conv_w, conv_b, pos_emb, patch_size,
                       matmul_dtype=jnp.bfloat16):
    """x_nchw: (B, C, H, W); conv_w: (C, C, ph, pw); conv_b: (C,);
       pos_emb: (1, n_patches, C).  Returns (B, n_patches, C)."""
    B, C, H, W = x_nchw.shape
    ph, pw = patch_size
    nh, nw = H // ph, W // pw
    n_patches = nh * nw
    K = C * ph * pw
    M = B * n_patches
    out_dtype = x_nchw.dtype

    tm, n_tiles, M_pad = _choose_row_tiling(
        M, K, C,
        jnp.dtype(matmul_dtype).itemsize,
        jnp.dtype(pos_emb.dtype).itemsize,
        jnp.dtype(out_dtype).itemsize,
    )

    # ---- patchify: (ci, dh, dw) flatten order matches PyTorch Conv2d weight
    #      flattening.  Under jit the slice/reshape/transpose/cast/pad fuse into
    #      a single HBM copy of the activation.
    patches = (
        x_nchw[:, :, :nh * ph, :nw * pw]
        .reshape(B, C, nh, ph, nw, pw)
        .transpose(0, 2, 4, 1, 3, 5)              # (B, nh, nw, C, ph, pw)
        .reshape(M, K)
        .astype(matmul_dtype)
    )
    if M_pad != M:
        patches = jnp.pad(patches, ((0, M_pad - M), (0, 0)))

    # Weight: (C_out, K) -> transpose once in the wrapper to (K, C_out).
    w2d = conv_w.reshape(C, K).T.astype(matmul_dtype)

    # Fold conv bias into the position embeddings; row-tile like x so any tm works.
    pos_eff = (pos_emb.reshape(n_patches, C) + conv_b.reshape(1, C)).astype(jnp.float32)
    pos_full = jnp.tile(pos_eff, (B, 1))           # (M, C)
    if M_pad != M:
        pos_full = jnp.pad(pos_full, ((0, M_pad - M), (0, 0)))

    cost = pl.CostEstimate(
        flops=2 * M * K * C,
        transcendentals=0,
        bytes_accessed=(M * K * jnp.dtype(matmul_dtype).itemsize
                        + K * C * jnp.dtype(matmul_dtype).itemsize
                        + M * C * (4 + jnp.dtype(out_dtype).itemsize)),
    )

    out_padded = pl.pallas_call(
        _embed_kernel,
        out_shape=jax.ShapeDtypeStruct((M_pad, C), out_dtype),
        grid_spec=pltpu.PrefetchScalarGridSpec(
            num_scalar_prefetch=0,
            grid=(n_tiles,),
            in_specs=[
                pl.BlockSpec((tm, K), lambda i: (i, 0)),
                pl.BlockSpec((K, C), lambda i: (0, 0),
                             pipeline_mode=pl.Buffered(1)),   # grid-invariant
                pl.BlockSpec((tm, C), lambda i: (i, 0)),
            ],
            out_specs=pl.BlockSpec((tm, C), lambda i: (i, 0)),
        ),
        compiler_params=pltpu.CompilerParams(
            dimension_semantics=("parallel",),
            vmem_limit_bytes=32 * 1024 * 1024,
        ),
        cost_estimate=cost,
    )(patches, w2d, pos_full)

    out = out_padded[:M] if M_pad != M else out_padded
    return out.reshape(B, n_patches, C)


if __name__ == "__main__":
    # Small shapes consistent with the module:
    #   img_size = 16, patchsize = 4  -> n_patches = (16//4)*(16//4) = 16
    #   in_channels = 4, batch = 2
    B, C, H, W = 2, 4, 16, 16
    ph, pw = 4, 4
    n_patches = (H // ph) * (W // pw)

    key = jax.random.PRNGKey(0)
    kx, kw, kb, kp = jax.random.split(key, 4)

    x = jax.random.normal(kx, (B, C, H, W), dtype=jnp.float32)
    # Conv2d(in_channels=C, out_channels=C, kernel_size=(ph,pw), stride=(ph,pw))
    conv_w = jax.random.normal(kw, (C, C, ph, pw), dtype=jnp.float32) * 0.1
    conv_b = jax.random.normal(kb, (C,), dtype=jnp.float32) * 0.1
    # nn.Parameter(torch.zeros(1, n_patches, C)) — init non-zero to exercise add
    pos_emb = jax.random.normal(kp, (1, n_patches, C), dtype=jnp.float32) * 0.02

    # Pure-JAX reference of the PyTorch forward (eval mode: dropout = identity)
    ref_conv = jax.lax.conv_general_dilated(
        x, conv_w, window_strides=(ph, pw), padding="VALID",
        dimension_numbers=("NCHW", "OIHW", "NCHW"),
    ) + conv_b.reshape(1, C, 1, 1)
    ref = ref_conv.reshape(B, C, n_patches).transpose(0, 2, 1) + pos_emb

    # Default path: bf16 matmul operands, f32 accumulation.
    out = channel_embeddings(x, conv_w, conv_b, pos_emb, (ph, pw))
    out = jax.block_until_ready(out)
    assert out.shape == (B, n_patches, C)
    assert jnp.allclose(out, ref, atol=2e-2, rtol=2e-2)

    # Exact path: f32 matmul, tight tolerance.
    out_f32 = channel_embeddings(x, conv_w, conv_b, pos_emb, (ph, pw),
                                 matmul_dtype=jnp.float32)
    out_f32 = jax.block_until_ready(out_f32)
    assert jnp.allclose(out_f32, ref, atol=1e-4, rtol=1e-4)

    print("KERNEL_OK")
</pallas_src>

<mosaic_0001>
module attributes {stable_mosaic.version = 11 : i64} {
  func.func @_embed_kernel(%arg0: i32, %arg1: memref<16x64xbf16, #tpu.memory_space<vmem>>, %arg2: memref<64x4xbf16, #tpu.memory_space<vmem>>, %arg3: memref<16x4xf32, #tpu.memory_space<vmem>>, %arg4: memref<16x4xf32, #tpu.memory_space<vmem>>) attributes {dimension_semantics = [#tpu.dimension_semantics<parallel>], iteration_bounds = array<i64: 2>, scalar_prefetch = 0 : i64, scratch_operands = 0 : i64, tpu.core_type = #tpu.core_type<tc>, window_params = [{transform_indices = @transform_0, window_bounds = array<i64: 16, 64>}, {pipeline_mode = #tpu.pipeline_mode<synchronous>, transform_indices = @transform_1, window_bounds = array<i64: 64, 4>}, {transform_indices = @transform_2, window_bounds = array<i64: 16, 4>}, {transform_indices = @transform_3, window_bounds = array<i64: 16, 4>}]} {
    %c0 = arith.constant 0 : index
    %c0_0 = arith.constant 0 : index
    %0 = vector.load %arg1[%c0, %c0_0] : memref<16x64xbf16, #tpu.memory_space<vmem>>, vector<16x64xbf16>
    %c0_1 = arith.constant 0 : index
    %c0_2 = arith.constant 0 : index
    %1 = vector.load %arg2[%c0_1, %c0_2] : memref<64x4xbf16, #tpu.memory_space<vmem>>, vector<64x4xbf16>
    %cst = arith.constant dense<0.000000e+00> : vector<16x4xf32>
    %2 = tpu.matmul %0, %1, %cst {dimension_numbers = #tpu.dot_dimension_numbers<[1], [0], [0], [1], [0, 0, 1, 1], [], []>} : vector<16x64xbf16>, vector<64x4xbf16>, vector<16x4xf32> -> vector<16x4xf32>
    %c0_3 = arith.constant 0 : index
    %c0_4 = arith.constant 0 : index
    %3 = vector.load %arg3[%c0_3, %c0_4] : memref<16x4xf32, #tpu.memory_space<vmem>>, vector<16x4xf32>
    %4 = arith.addf %2, %3 : vector<16x4xf32>
    %c0_5 = arith.constant 0 : index
    %c0_6 = arith.constant 0 : index
    %5 = vector.load %arg4[%c0_5, %c0_6] : memref<16x4xf32, #tpu.memory_space<vmem>>, vector<16x4xf32>
    tpu.vector_store %arg4[%c0_5, %c0_6], %4 {strides = array<i32>} : memref<16x4xf32, #tpu.memory_space<vmem>>, vector<16x4xf32>,
    return
  }
  func.func @transform_0(%arg0: i32) -> (i32, i32) {
    %c0_i32 = arith.constant 0 : i32
    %c0_i32_0 = arith.constant 0 : i32
    return %arg0, %c0_i32 : i32, i32
  }
  func.func @transform_1(%arg0: i32) -> (i32, i32) {
    %c0_i32 = arith.constant 0 : i32
    %c0_i32_0 = arith.constant 0 : i32
    %c0_i32_1 = arith.constant 0 : i32
    return %c0_i32, %c0_i32_0 : i32, i32
  }
  func.func @transform_2(%arg0: i32) -> (i32, i32) {
    %c0_i32 = arith.constant 0 : i32
    %c0_i32_0 = arith.constant 0 : i32
    return %arg0, %c0_i32 : i32, i32
  }
  func.func @transform_3(%arg0: i32) -> (i32, i32) {
    %c0_i32 = arith.constant 0 : i32
    %c0_i32_0 = arith.constant 0 : i32
    return %arg0, %c0_i32 : i32, i32
  }
}

</mosaic_0001>

<llo_original>
// kernel: channel_embeddings.1
$region0: #{channel_embeddings.1}
  #allocation0 [shape = 'u32[]', space=smem, size = 0x4, offset = 0x4, fixed_abs, tag = 'smem constant byte address 0x4 - core index']
  #allocation1 [shape = 'u32[144,128]{1,0:T(1,128)}', space=vmem, size = 0x12000, scoped, tag = 'internal scratch']
  %s0 = inlined_call_operand.vmem [shape: bf16[32,64], index: 0, kind: input, shape index: {}]
  %s1 = inlined_call_operand.vmem [shape: bf16[64,4], index: 1, kind: input, shape index: {}]
  %s2 = inlined_call_operand.vmem [shape: f32[32,4], index: 2, kind: input, shape index: {}]
  %s3 = inlined_call_operand.vmem [shape: f32[32,4], index: 3, kind: output, shape index: {}]
  %s4 = sld [smem:[#allocation0]]
  $region45: #{channel_embeddings.1} parent=0
    _
  %s6 = ssub.s32 1, %s4
  %s7 = scalar_select 0, %s6, %s4
  loop: start=0, step=1, limit=4
  $region2: #{channel_embeddings.1} parent=0 // loop_pre_header
    _
  $region3: #{channel_embeddings.1} parent=0 // loop_header
    %s9 = sphi 0, %s13
    %p10 = scmp.ge.s32.totalorder %s9, 4
    %s19 = sphi 0, %s21
    %s22 = sphi 0, %s19
    %s23 = sphi 0, %s22
    %s39 = sphi 0, %s23
    %s43 = sphi 0, %s43
    %s45 = sphi 0, %s43
    %s46 = sphi 0, %s45
    %s60 = sphi 0, %s46
    %s66 = sphi 0, %s68
    %s69 = sphi 0, %s66
    %s70 = sphi 0, %s69
    %s86 = sphi 0, %s70
    %s92 = sphi 0, %s94
    %s95 = sphi 0, %s92
    %s96 = sphi 0, %s95
    %s112 = sphi 0, %s96
  $region4: #{channel_embeddings.1} parent=0 // loop_header_branch
    %12 = sbr.rel (%p10) target = $region8
  $region5: #{channel_embeddings.1} parent=0 // loop_body
    %s14 = ssub.s32 %s9, 1
    %s15 = ssub.s32 %s9, 2
    %s16 = sadd.s32 %s9, 1
    %s17 = ssub.s32 %s9, %s16
    %p18 = scmp.eq.s32.totalorder %s17, 0
    %s20 = sadd.s32 %s19, 1
    %s21 = scalar_select %p18, %s19, %s20
    %p24 = pneg %p18
    %p25 = scmp.eq.s32.totalorder %s9, 1
    %p26 = por %p24, %p25
    %p27 = scmp.ne.s32.totalorder %s19, %s22
    %p28 = scmp.eq.s32.totalorder %s9, 0
    %p29 = por %p27, %p28
    %p30 = scmp.ne.s32.totalorder %s19, %s22
    %p31 = scmp.eq.s32.totalorder %s14, 1
    %p32 = por %p30, %p31
    %p33 = scmp.ne.s32.totalorder %s22, %s23
    %p34 = scmp.eq.s32.totalorder %s14, 0
    %p35 = por %p33, %p34
    %p36 = scmp.ne.s32.totalorder %s22, %s23
    %p37 = scmp.eq.s32.totalorder %s15, 1
    %p38 = por %p36, %p37
    %p40 = scmp.ne.s32.totalorder %s23, %s39
    %p41 = scmp.eq.s32.totalorder %s15, 0
    %p42 = por %p40, %p41
    %s44 = sadd.s32 %s43, 1
    %p47 = scmp.eq.s32.totalorder %s9, 1
    %p48 = scmp.ne.s32.totalorder %s43, %s45
    %p49 = scmp.eq.s32.totalorder %s9, 0
    %p50 = por %p48, %p49
    %p51 = scmp.ne.s32.totalorder %s43, %s45
    %p52 = scmp.eq.s32.totalorder %s14, 1
    %p53 = por %p51, %p52
    %p54 = scmp.ne.s32.totalorder %s45, %s46
    %p55 = scmp.eq.s32.totalorder %s14, 0
    %p56 = por %p54, %p55
    %p57 = scmp.ne.s32.totalorder %s45, %s46
    %p58 = scmp.eq.s32.totalorder %s15, 1
    %p59 = por %p57, %p58
    %p61 = scmp.ne.s32.totalorder %s46, %s60
    %p62 = scmp.eq.s32.totalorder %s15, 0
    %p63 = por %p61, %p62
    %s64 = ssub.s32 %s9, %s16
    %p65 = scmp.eq.s32.totalorder %s64, 0
    %s67 = sadd.s32 %s66, 1
    %s68 = scalar_select %p65, %s66, %s67
    %p71 = pneg %p65
    %p72 = scmp.eq.s32.totalorder %s9, 1
    %p73 = por %p71, %p72
    %p74 = scmp.ne.s32.totalorder %s66, %s69
    %p75 = scmp.eq.s32.totalorder %s9, 0
    %p76 = por %p74, %p75
    %p77 = scmp.ne.s32.totalorder %s66, %s69
    %p78 = scmp.eq.s32.totalorder %s14, 1
    %p79 = por %p77, %p78
    %p80 = scmp.ne.s32.totalorder %s69, %s70
    %p81 = scmp.eq.s32.totalorder %s14, 0
    %p82 = por %p80, %p81
    %p83 = scmp.ne.s32.totalorder %s69, %s70
    %p84 = scmp.eq.s32.totalorder %s15, 1
    %p85 = por %p83, %p84
    %p87 = scmp.ne.s32.totalorder %s70, %s86
    %p88 = scmp.eq.s32.totalorder %s15, 0
    %p89 = por %p87, %p88
    %s90 = ssub.s32 %s9, %s16
    %p91 = scmp.eq.s32.totalorder %s90, 0
    %s93 = sadd.s32 %s92, 1
    %s94 = scalar_select %p91, %s92, %s93
    %p97 = pneg %p91
    %p98 = scmp.eq.s32.totalorder %s9, 1
    %p99 = por %p97, %p98
    %p100 = scmp.ne.s32.totalorder %s92, %s95
    %p101 = scmp.eq.s32.totalorder %s9, 0
    %p102 = por %p100, %p101
    %p103 = scmp.ne.s32.totalorder %s92, %s95
    %p104 = scmp.eq.s32.totalorder %s14, 1
    %p105 = por %p103, %p104
    %p106 = scmp.ne.s32.totalorder %s95, %s96
    %p107 = scmp.eq.s32.totalorder %s14, 0
    %p108 = por %p106, %p107
    %p109 = scmp.ne.s32.totalorder %s95, %s96
    %p110 = scmp.eq.s32.totalorder %s15, 1
    %p111 = por %p109, %p110
    %p113 = scmp.ne.s32.totalorder %s96, %s112
    %p114 = scmp.eq.s32.totalorder %s15, 0
    %p115 = por %p113, %p114
    %p116 = scmp.le.s32.totalorder 1, %s9
    %p117 = scmp.lt.s32.totalorder %s9, 3
    %p118 = pnand %p116, %p117
    %p119 = pneg %p118
    // Predicated region
    $region9: #{channel_embeddings.1} parent=5 // pred_check
      _
    $region10: #{channel_embeddings.1} parent=5 // pred_check_branch
      %121 = sbr.rel (%p118) target = $region12
    $region11: #{channel_embeddings.1} parent=5 // pred_region
      %s122 = ssub.s32 %s9, 1
      // Predicated region
      $region13: #{channel_embeddings.1} parent=11 // pred_check
        %p123 = pneg %p56
      $region14: #{channel_embeddings.1} parent=11 // pred_check_branch
        %125 = sbr.rel (%p123) target = $region16
      $region15: #{channel_embeddings.1} parent=11 // pred_region
        _
      $region16: #{channel_embeddings.1} parent=11 // pred_fallthru
        _
    $region12: #{channel_embeddings.1} parent=5 // pred_fallthru
      _
    %p126 = scmp.lt.s32.totalorder %s9, 2
    // Predicated region
    $region17: #{channel_embeddings.1} parent=5 // pred_check
      %p127 = pneg %p126
    $region18: #{channel_embeddings.1} parent=5 // pred_check_branch
      %129 = sbr.rel (%p127) target = $region20
    $region19: #{channel_embeddings.1} parent=5 // pred_region
      // Predicated region
      $region21: #{channel_embeddings.1} parent=19 // pred_check
        %p130 = pneg %p29
      $region22: #{channel_embeddings.1} parent=19 // pred_check_branch
        %132 = sbr.rel (%p130) target = $region24
      $region23: #{channel_embeddings.1} parent=19 // pred_region
        %s133 = smul.u32 2, %s9
        %p134 = scmp.lt.s32.totalorder %s133, 3
        %s135 = scalar_select %p134, %s133, 3
        %s136 = smul.addr %s135, 4
        %s137 = scalar_lea.vmem %s0, %s136
        %s138 = smul.u32 2, %s9
      $region24: #{channel_embeddings.1} parent=19 // pred_fallthru
        _
      // Predicated region
      $region25: #{channel_embeddings.1} parent=19 // pred_check
        %p139 = pneg %p76
      $region26: #{channel_embeddings.1} parent=19 // pred_check_branch
        %141 = sbr.rel (%p139) target = $region28
      $region27: #{channel_embeddings.1} parent=19 // pred_region
        %s142 = smul.u32 2, %s9
        %p143 = scmp.lt.s32.totalorder %s142, 3
        %s144 = scalar_select %p143, %s142, 3
        %s145 = smul.addr %s144, 8
        %s146 = scalar_lea.vmem %s2, %s145
        %s147 = smul.u32 2, %s9
      $region28: #{channel_embeddings.1} parent=19 // pred_fallthru
        _
    $region20: #{channel_embeddings.1} parent=5 // pred_fallthru
      _
    %p148 = scmp.le.s32.totalorder 1, %s9
    %p149 = scmp.lt.s32.totalorder %s9, 3
    %p150 = pnand %p148, %p149
    %p151 = pneg %p150
    // Predicated region
    $region29: #{channel_embeddings.1} parent=5 // pred_check
      _
    $region30: #{channel_embeddings.1} parent=5 // pred_check_branch
      %153 = sbr.rel (%p150) target = $region32
    $region31: #{channel_embeddings.1} parent=5 // pred_region
      %s154 = ssub.s32 %s9, 1
      %s155 = smul.u32 2, %s14
      %p156 = scmp.lt.s32.totalorder %s155, 3
      %s157 = scalar_select %p156, %s155, 3
      %s158 = smul.addr %s157, 4
      %s159 = scalar_lea.vmem %s0, %s158
      %p160 = pneg %p35
      %p161 = pneg %p32
      %p162 = pneg %p56
      %p163 = pneg %p53
      %s164 = smul.u32 2, %s14
      %p165 = scmp.lt.s32.totalorder %s164, 3
      %s166 = scalar_select %p165, %s164, 3
      %s167 = smul.addr %s166, 8
      %s168 = scalar_lea.vmem %s2, %s167
      %p169 = pneg %p82
      %p170 = pneg %p79
      %p171 = pneg %p108
      %p172 = pneg %p105
      %s173 = smul.u32 2, %s14
      %p174 = scmp.lt.s32.totalorder %s173, 3
      %s175 = scalar_select %p174, %s173, 3
      %s176 = smul.addr %s175, 8
      %s177 = scalar_lea.vmem %s3, %s176
      %s178 = smul.u32 2, %s14
      %p179 = scmp.lt.s32.totalorder %s178, 3
      %s180 = scalar_select %p179, %s178, 3
      %s181 = smul.addr %s180, 4
      %s182 = scalar_lea.vmem %s0, %s181
      %s183 = smul.u32 2, %s14
      %s184 = smul.u32 2, %s14
      %p185 = scmp.lt.s32.totalorder %s184, 3
      %s186 = scalar_select %p185, %s184, 3
      %s187 = smul.addr %s186, 8
      %s188 = scalar_lea.vmem %s2, %s187
      %s189 = smul.u32 2, %s14
      %s190 = smul.u32 2, %s14
      %p191 = scmp.lt.s32.totalorder %s190, 3
      %s192 = scalar_select %p191, %s190, 3
      %s193 = smul.addr %s192, 8
      %s194 = scalar_lea.vmem %s3, %s193
      %s195 = smul.u32 2, %s14
      %v197 = vld [vmem:[%s182] sm:$0xf]
      %v198 = vld [vmem:[%s182 + $0x4] sm:$0xf]
      %v199 = vld [vmem:[%s1] sm:$0xf]
      %v200 = vld [vmem:[%s1 + $0x4] sm:$0xf]
      %v201 = vld [vmem:[%s1 + $0x8] sm:$0xf]
      %v202 = vld [vmem:[%s1 + $0xc] sm:$0xf]
      %v203 = vld [vmem:[%s1 + $0x10] sm:$0xf]
      %v204 = vld [vmem:[%s1 + $0x14] sm:$0xf]
      %v205 = vld [vmem:[%s1 + $0x18] sm:$0xf]
      %v206 = vld [vmem:[%s1 + $0x1c] sm:$0xf]
      %v207 = vld [vmem:[%s188] sm:$0xff]
      %v208 = vld [vmem:[%s188 + $0x8] sm:$0xff]
      %v211 = vunpack.c.l.b16 %v197
      %v212 = vunpack.c.l.b16 %v198
      %v213 = vpack.c.b16 %v212, %v211
      %v222 = vunpack.c.l.b16 %v199
      %v223 = vunpack.c.l.b16 %v200
      %v224 = vunpack.c.l.b16 %v201
      %v225 = vunpack.c.l.b16 %v202
      %v226 = vunpack.c.l.b16 %v203
      %v227 = vunpack.c.l.b16 %v204
      %v228 = vunpack.c.l.b16 %v205
      %v229 = vunpack.c.l.b16 %v206
      %v230 = vpack.c.b16 %v223, %v222
      %v231 = vpack.c.b16 %v225, %v224
      %v232 = vpack.c.b16 %v227, %v226
      %v233 = vpack.c.b16 %v229, %v228
      %vm238 = vcmask 523264
      %v240 = vsel %vm238, %v213, 0
      %242 = vmatprep.subr.bf16.mxu0 0
      %243 = vmatpush1.bf16.msra.mxu0 0
      %244 = vmatprep.subr.bf16.mxu0 0
      %245 = vmatpush1.bf16.msra.mxu0 0
      %246 = vmatprep.subr.bf16.mxu0 0
      %247 = vmatpush1.bf16.msra.mxu0 0
      %248 = vmatprep.subr.bf16.mxu0 0
      %249 = vmatpush1.bf16.msra.mxu0 0
      %250 = vmatprep.subr.bf16.mxu0 0
      %251 = vmatpush1.bf16.msra.mxu0 %v233
      %252 = vmatprep.subr.bf16.mxu0 0
      %253 = vmatpush1.bf16.msra.mxu0 %v232
      %254 = vmatprep.subr.bf16.mxu0 0
      %255 = vmatpush1.bf16.msra.mxu0 %v231
      %256 = vmatprep.subr.bf16.mxu0 0
      %257 = vmatpush1.bf16.msra.mxu0 %v230
      %258 = vmatprep.subr.bf16.mxu0 0
      %259 = vmatpush2.bf16.msra.mxu0 0
      %260 = vmatprep.subr.bf16.mxu0 0
      %261 = vmatpush2.bf16.msra.mxu0 0
      %262 = vmatprep.subr.bf16.mxu0 0
      %263 = vmatpush2.bf16.msra.mxu0 0
      %264 = vmatprep.subr.bf16.mxu0 0
      %265 = vmatpush2.bf16.msra.mxu0 0
      %266 = vmatprep.subr.bf16.mxu0 0
      %267 = vmatpush2.bf16.msra.mxu0 0
      %268 = vmatprep.subr.bf16.mxu0 0
      %269 = vmatpush2.bf16.msra.mxu0 0
      %270 = vmatprep.subr.bf16.mxu0 0
      %271 = vmatpush2.bf16.msra.mxu0 0
      %272 = vmatprep.subr.bf16.mxu0 0
      %273 = vmatpush2.bf16.msra.mxu0 0
      %274 = vmatprep.mubr.bf16.mxu0 0
      %275 = vmatmul.mubr.bf16.gmra.mxu0 %v240
      %v276 = vpop.f32.mrf.mxu0
      %v277 = vadd.f32 %v207, %v276
      %v278 = vpop.f32.mrf.mxu0
      %v279 = vpop.f32.mrf.mxu0
      %v280 = vadd.f32 %v208, %v279
      %v281 = vpop.f32.mrf.mxu0
      %282 = vdwg.mxu0
      %vm283 = vcmask 31744
      %284 = vst.msk [vmem:[%s194] sm:$0xff] %vm283, %v277
      %285 = vst.msk [vmem:[%s194 + $0x8] sm:$0xff] %vm283, %v280
      %s286 = smul.u32 2, %s14
      %p287 = scmp.lt.s32.totalorder %s286, 3
      %s288 = scalar_select %p287, %s286, 3
      %s289 = smul.addr %s288, 8
      %s290 = scalar_lea.vmem %s3, %s289
      // Predicated region
      $region33: #{channel_embeddings.1} parent=31 // pred_check
        %p291 = pneg %p105
      $region34: #{channel_embeddings.1} parent=31 // pred_check_branch
        %293 = sbr.rel (%p291) target = $region36
      $region35: #{channel_embeddings.1} parent=31 // pred_region
        %s294 = smul.u32 2, %s14
      $region36: #{channel_embeddings.1} parent=31 // pred_fallthru
        _
    $region32: #{channel_embeddings.1} parent=5 // pred_fallthru
      _
    %p295 = scmp.le.s32.totalorder 2, %s9
    // Predicated region
    $region37: #{channel_embeddings.1} parent=5 // pred_check
      %p296 = pneg %p295
    $region38: #{channel_embeddings.1} parent=5 // pred_check_branch
      %298 = sbr.rel (%p296) target = $region40
    $region39: #{channel_embeddings.1} parent=5 // pred_region
      %s299 = ssub.s32 %s9, 2
      // Predicated region
      $region41: #{channel_embeddings.1} parent=39 // pred_check
        %p300 = pneg %p111
      $region42: #{channel_embeddings.1} parent=39 // pred_check_branch
        %302 = sbr.rel (%p300) target = $region44
      $region43: #{channel_embeddings.1} parent=39 // pred_region
        %s303 = smul.u32 2, %s15
        %p304 = scmp.lt.s32.totalorder %s303, 3
        %s305 = scalar_select %p304, %s303, 3
        %s306 = smul.addr %s305, 8
        %s307 = scalar_lea.vmem %s3, %s306
      $region44: #{channel_embeddings.1} parent=39 // pred_fallthru
        _
    $region40: #{channel_embeddings.1} parent=5 // pred_fallthru
      _
  $region6: #{channel_embeddings.1} parent=0 // loop_footer
    %s13 = sadd.s32 1, %s9
  $region7: #{channel_embeddings.1} parent=0 // loop_footer_branch
    %8 = sbr.rel target = $region3
  $region8: #{channel_embeddings.1} parent=0 // loop_exit
    _

</llo_original>
